<compile_context>
chip_gen: v6e
topology: v6e:2x2x1
jax: 0.10.0
libtpu: 0.0.40
codegen_flags: <defaults>
</compile_context>

<pallas_src>
import functools

import jax
import jax.numpy as jnp
from jax.experimental import pallas as pl
from jax.experimental.pallas import tpu as pltpu


def _grouped_network_kernel(xt_ref, w1_ref, b1_ref, w2_ref, b2_ref, o_ref):
    # xt_ref: (20, TILE_B) bf16   -- batch on lanes (lane-dense load)
    # w1_ref: (10, 20)   bf16     -- resident in VMEM across grid steps
    # b1_ref: (10, 1)    f32      -- broadcasts over lanes
    # w2_ref: (10, 1)    f32      -- W2 as a column for broadcast-multiply
    # b2_ref: (1,)       f32      -- scalar in SMEM
    # o_ref : (1, TILE_B) f32     -- lane-dense store
    h = jnp.dot(w1_ref[...], xt_ref[...], preferred_element_type=jnp.float32)
    h = jnp.maximum(h + b1_ref[...], 0.0)                          # (10, TILE_B)
    # Layer 2 on VPU + XLU (broadcast mul + sublane reduce) instead of a second
    # MXU push at <0.1% utilization.
    out = jnp.sum(w2_ref[...] * h, axis=0, keepdims=True)          # (1, TILE_B)
    o_ref[...] = out + b2_ref[0]


def _round_up(n, m):
    return ((n + m - 1) // m) * m


def grouped_network_forward_bm(xt, w1, b1, w2, b2, *,
                               tile_b_max=32768,
                               compute_dtype=jnp.bfloat16):
    """Batch-minor entry point (no relayout on the hot input).

    xt: (20, B)  input, batch on the minor (lane) axis
    w1: (10, 20), b1: (10,), w2: (1, 10), b2: (1,)
    Returns (1, B) float32 (lane-dense; reshape at the consumer if needed).
    """
    in_features, B = xt.shape
    hidden = w1.shape[0]

    # Tile: multiple of 128 lanes, large enough to amortize the ~0.35 us/step
    # grid overhead, but small enough that the grid has >= 2 steps (megacore).
    tile_b = max(128, min(int(tile_b_max), _round_up(pl.cdiv(B, 2), 128)))
    grid = (pl.cdiv(B, tile_b),)   # ragged last block handled by Pallas masking

    xt_c = xt.astype(compute_dtype)                          # no-op if already bf16
    w1_c = w1.astype(compute_dtype)                          # (10, 20)
    b1_c = b1.astype(jnp.float32).reshape(hidden, 1)         # (10, 1)
    w2_c = w2.astype(jnp.float32).reshape(hidden, 1)         # (10, 1) column
    b2_s = b2.astype(jnp.float32).reshape(1)                 # (1,) scalar via SMEM

    # VMEM budget: double-buffered x tile (20->32 packed bf16 sublanes) and
    # output tile (1->8 f32 sublanes), plus weights + headroom.
    x_tile_bytes = 32 * tile_b * 2
    o_tile_bytes = 8 * tile_b * 4
    vmem_bytes = 2 * (x_tile_bytes + o_tile_bytes) + (2 << 20)
    vmem_limit = min(64 << 20, max(vmem_bytes, 16 << 20))

    out_t = pl.pallas_call(
        _grouped_network_kernel,
        out_shape=jax.ShapeDtypeStruct((1, B), jnp.float32),
        grid=grid,
        in_specs=[
            pl.BlockSpec((in_features, tile_b), lambda i: (0, i)),   # xT tile
            pl.BlockSpec((hidden, in_features), lambda i: (0, 0)),   # W1 resident
            pl.BlockSpec((hidden, 1), lambda i: (0, 0)),             # b1 resident
            pl.BlockSpec((hidden, 1), lambda i: (0, 0)),             # W2 column resident
            pl.BlockSpec(memory_space=pltpu.MemorySpace.SMEM),       # b2 scalar
        ],
        out_specs=pl.BlockSpec((1, tile_b), lambda i: (0, i)),
        compiler_params=pltpu.CompilerParams(
            dimension_semantics=("parallel",),
            vmem_limit_bytes=vmem_limit,
        ),
    )(xt_c, w1_c, b1_c, w2_c, b2_s)

    return out_t                                              # (1, B) f32


def grouped_network_forward(x, w1, b1, w2, b2, **kwargs):
    """PyTorch-layout entry point. x: (B, 20). Returns (B, 1) float32.

    The transpose+cast is one fused pass under jit; if the producer can emit
    batch-minor (20, B) directly, call grouped_network_forward_bm instead and
    skip it entirely. The final (B, 1) view is only for PyTorch shape parity;
    consumers that accept (1, B) or (B,) should take out_t directly.
    """
    B = x.shape[0]
    xt = jnp.transpose(x)                                     # (20, B)
    out_t = grouped_network_forward_bm(xt, w1, b1, w2, b2, **kwargs)
    return out_t.reshape(B, 1)


if __name__ == "__main__":
    key = jax.random.PRNGKey(0)
    k_x, k_w1, k_b1, k_w2, k_b2, k_x2 = jax.random.split(key, 6)

    batch = 8
    in_features = 20
    hidden = 10          # GroupedLinear out_features
    out_features = 1

    # Deterministic parameter init (shapes from the module's __init__).
    # GroupedLinear uses torch.randn for weight and bias.
    w1 = jax.random.normal(k_w1, (hidden, in_features), dtype=jnp.float32)
    b1 = jax.random.normal(k_b1, (hidden,), dtype=jnp.float32)
    # nn.Linear(10, 1): uniform(-1/sqrt(10), 1/sqrt(10)) init.
    bound = 1.0 / jnp.sqrt(jnp.float32(hidden))
    w2 = jax.random.uniform(k_w2, (out_features, hidden), dtype=jnp.float32,
                            minval=-bound, maxval=bound)
    b2 = jax.random.uniform(k_b2, (out_features,), dtype=jnp.float32,
                            minval=-bound, maxval=bound)

    fwd = jax.jit(functools.partial(grouped_network_forward, w1=w1, b1=b1, w2=w2, b2=b2))

    def ref_fn(x):
        # bf16-emulated reference (matches the MXU's bf16 multiply / f32 accumulate)
        xb = x.astype(jnp.bfloat16).astype(jnp.float32)
        w1b = w1.astype(jnp.bfloat16).astype(jnp.float32)
        return jnp.maximum(xb @ w1b.T + b1, 0.0) @ w2.T + b2

    # --- main check at the module's natural small shape ---
    x = jax.random.normal(k_x, (batch, in_features), dtype=jnp.float32)
    out = jax.block_until_ready(fwd(x))
    assert out.shape == (batch, 1)
    assert jnp.allclose(out, ref_fn(x), atol=1e-4, rtol=1e-4)
    # Loose sanity check against the exact f32 PyTorch math.
    ref_f32 = jnp.maximum(x @ w1.T + b1, 0.0) @ w2.T + b2
    assert jnp.allclose(out, ref_f32, atol=5e-2, rtol=5e-2)

    # --- ragged-batch check (exercises the cdiv grid + masked last block) ---
    batch2 = 300
    x2 = jax.random.normal(k_x2, (batch2, in_features), dtype=jnp.float32)
    out2 = jax.block_until_ready(jax.jit(functools.partial(
        grouped_network_forward, w1=w1, b1=b1, w2=w2, b2=b2))(x2))
    assert out2.shape == (batch2, 1)
    assert jnp.allclose(out2, ref_fn(x2), atol=1e-4, rtol=1e-4)

    # TODO(synk): backward-hook / per-group gradient rules are training-time-only
    # (they rewrite .grad); they have no forward-pass Pallas equivalent.
    print("KERNEL_OK")
</pallas_src>

<mosaic_0001>
module attributes {stable_mosaic.version = 11 : i64} {
  func.func @_grouped_network_kernel(%arg0: i32, %arg1: memref<20x128xbf16, #tpu.memory_space<vmem>>, %arg2: memref<10x20xbf16, #tpu.memory_space<vmem>>, %arg3: memref<10x1xf32, #tpu.memory_space<vmem>>, %arg4: memref<10x1xf32, #tpu.memory_space<vmem>>, %arg5: memref<1xf32, #tpu.memory_space<smem>>, %arg6: memref<1x128xf32, #tpu.memory_space<vmem>>) attributes {dimension_semantics = [#tpu.dimension_semantics<parallel>], iteration_bounds = array<i64: 1>, scalar_prefetch = 0 : i64, scratch_operands = 0 : i64, tpu.core_type = #tpu.core_type<tc>, window_params = [{transform_indices = @transform_0, window_bounds = array<i64: 20, 128>}, {pipeline_mode = #tpu.pipeline_mode<synchronous>, transform_indices = @transform_1, window_bounds = array<i64: 10, 20>}, {pipeline_mode = #tpu.pipeline_mode<synchronous>, transform_indices = @transform_2, window_bounds = array<i64: 10, 1>}, {pipeline_mode = #tpu.pipeline_mode<synchronous>, transform_indices = @transform_3, window_bounds = array<i64: 10, 1>}, {transform_indices = @transform_4, window_bounds = array<i64: 1>}, {transform_indices = @transform_5, window_bounds = array<i64: 1, 128>}]} {
    %c0 = arith.constant 0 : index
    %c0_0 = arith.constant 0 : index
    %0 = vector.load %arg2[%c0, %c0_0] : memref<10x20xbf16, #tpu.memory_space<vmem>>, vector<10x20xbf16>
    %c0_1 = arith.constant 0 : index
    %c0_2 = arith.constant 0 : index
    %1 = vector.load %arg1[%c0_1, %c0_2] : memref<20x128xbf16, #tpu.memory_space<vmem>>, vector<20x128xbf16>
    %cst = arith.constant dense<0.000000e+00> : vector<10x128xf32>
    %2 = tpu.matmul %0, %1, %cst {dimension_numbers = #tpu.dot_dimension_numbers<[1], [0], [0], [1], [0, 0, 1, 1], [], []>} : vector<10x20xbf16>, vector<20x128xbf16>, vector<10x128xf32> -> vector<10x128xf32>
    %c0_3 = arith.constant 0 : index
    %c0_4 = arith.constant 0 : index
    %3 = vector.load %arg3[%c0_3, %c0_4] : memref<10x1xf32, #tpu.memory_space<vmem>>, vector<10x1xf32>
    %4 = vector.broadcast %3 : vector<10x1xf32> to vector<10x128xf32>
    %5 = arith.addf %2, %4 : vector<10x128xf32>
    %cst_5 = arith.constant 0.000000e+00 : f32
    %6 = vector.broadcast %cst_5 : f32 to vector<10x128xf32>
    %7 = arith.maximumf %5, %6 : vector<10x128xf32>
    %c0_6 = arith.constant 0 : index
    %c0_7 = arith.constant 0 : index
    %8 = vector.load %arg4[%c0_6, %c0_7] : memref<10x1xf32, #tpu.memory_space<vmem>>, vector<10x1xf32>
    %9 = vector.broadcast %8 : vector<10x1xf32> to vector<10x128xf32>
    %10 = arith.mulf %9, %7 : vector<10x128xf32>
    %cst_8 = arith.constant dense<0.000000e+00> : vector<128xf32>
    %11 = vector.multi_reduction <add>, %10, %cst_8 [0] : vector<10x128xf32> to vector<128xf32>
    %12 = vector.shape_cast %11 : vector<128xf32> to vector<1x128xf32>
    %c0_9 = arith.constant 0 : index
    %13 = memref.load %arg5[%c0_9] : memref<1xf32, #tpu.memory_space<smem>>
    %14 = vector.broadcast %13 : f32 to vector<1x128xf32>
    %15 = arith.addf %12, %14 : vector<1x128xf32>
    %c0_10 = arith.constant 0 : index
    %c0_11 = arith.constant 0 : index
    %16 = vector.load %arg6[%c0_10, %c0_11] : memref<1x128xf32, #tpu.memory_space<vmem>>, vector<1x128xf32>
    tpu.vector_store %arg6[%c0_10, %c0_11], %15 {strides = array<i32>} : memref<1x128xf32, #tpu.memory_space<vmem>>, vector<1x128xf32>,
    return
  }
  func.func @transform_0(%arg0: i32) -> (i32, i32) {
    %c0_i32 = arith.constant 0 : i32
    %c0_i32_0 = arith.constant 0 : i32
    return %c0_i32, %arg0 : i32, i32
  }
  func.func @transform_1(%arg0: i32) -> (i32, i32) {
    %c0_i32 = arith.constant 0 : i32
    %c0_i32_0 = arith.constant 0 : i32
    %c0_i32_1 = arith.constant 0 : i32
    return %c0_i32, %c0_i32_0 : i32, i32
  }
  func.func @transform_2(%arg0: i32) -> (i32, i32) {
    %c0_i32 = arith.constant 0 : i32
    %c0_i32_0 = arith.constant 0 : i32
    %c0_i32_1 = arith.constant 0 : i32
    return %c0_i32, %c0_i32_0 : i32, i32
  }
  func.func @transform_3(%arg0: i32) -> (i32, i32) {
    %c0_i32 = arith.constant 0 : i32
    %c0_i32_0 = arith.constant 0 : i32
    %c0_i32_1 = arith.constant 0 : i32
    return %c0_i32, %c0_i32_0 : i32, i32
  }
  func.func @transform_4(%arg0: i32) -> i32 {
    %c0_i32 = arith.constant 0 : i32
    %c0_i32_0 = arith.constant 0 : i32
    return %c0_i32 : i32
  }
  func.func @transform_5(%arg0: i32) -> (i32, i32) {
    %c0_i32 = arith.constant 0 : i32
    %c0_i32_0 = arith.constant 0 : i32
    return %c0_i32, %arg0 : i32, i32
  }
}

</mosaic_0001>

<llo_original>
// kernel: grouped_network_forward.1
$region0: #{grouped_network_forward.1}
  #allocation0 [shape = 'u32[]', space=smem, size = 0x4, offset = 0x4, fixed_abs, tag = 'smem constant byte address 0x4 - core index']
  #allocation1 [shape = 'u32[144,128]{1,0:T(1,128)}', space=vmem, size = 0x12000, scoped, tag = 'internal scratch']
  #allocation2 [shape = 'f32[1]{0:T(128)S(6)}', space=smem, size = 0x200, scoped, tag = 'scoped memory for grouped_network_forward.1']
  %s0 = inlined_call_operand.vmem [shape: bf16[20,8], index: 0, kind: input, shape index: {}]
  %s1 = inlined_call_operand.vmem [shape: bf16[10,20], index: 1, kind: input, shape index: {}]
  %s2 = inlined_call_operand.vmem [shape: f32[10,1], index: 2, kind: input, shape index: {}]
  %s3 = inlined_call_operand.hbm [shape: f32[10,1], index: 3, kind: input, shape index: {}]
  %s4 = inlined_call_operand.<no memory space> [shape: f32[1], index: 4, kind: input, shape index: {}]
  %s5 = inlined_call_operand.hbm [shape: f32[1,8], index: 5, kind: output, shape index: {}]
  %s6 = sld [smem:[#allocation0]]
  $region34: #{grouped_network_forward.1} parent=0
    _
  %s8 = ssub.s32 1, %s6
  %s9 = scalar_select 0, %s8, %s6
  %10 = sst [smem:[#allocation2]] %s4
  $region1: #{grouped_network_forward.1} parent=0
    #allocation3 [shape = 'u8[8192]{0}', space=vmem, size = 0x2000, scoped, tag = 'input window, operand 3, single buffered']
    #allocation4 [shape = 's32[1]{0}', space=sflag, size = 0x4, scoped, tag = 'scoped memory for grouped_network_forward.1']
    #allocation5 [shape = 's32[1]{0}', space=sflag, size = 0x4, scoped, tag = 'scoped memory for grouped_network_forward.1']
    #allocation6 [shape = 'u8[512]{0}', space=vmem, size = 0x400, scoped, tag = 'output window, operand 0, single buffered']
    %11 = vsyncpa [#allocation4], 0
    %12 = vsyncpa [#allocation5], 0
    // Predicated region
    $region2: #{grouped_network_forward.1} parent=1 // pred_check
      _
    $region3: #{grouped_network_forward.1} parent=1 // pred_check_branch
      %14 = sbr.rel (0) target = $region5
    $region4: #{grouped_network_forward.1} parent=1 // pred_region
      _
    $region5: #{grouped_network_forward.1} parent=1 // pred_fallthru
      _
    // Predicated region
    $region6: #{grouped_network_forward.1} parent=1 // pred_check
      _
    $region7: #{grouped_network_forward.1} parent=1 // pred_check_branch
      %16 = sbr.rel (0) target = $region9
    $region8: #{grouped_network_forward.1} parent=1 // pred_region
      _
    $region9: #{grouped_network_forward.1} parent=1 // pred_fallthru
      _
    // Predicated region
    $region10: #{grouped_network_forward.1} parent=1 // pred_check
      _
    $region11: #{grouped_network_forward.1} parent=1 // pred_check_branch
      %18 = sbr.rel (0) target = $region13
    $region12: #{grouped_network_forward.1} parent=1 // pred_region
      _
    $region13: #{grouped_network_forward.1} parent=1 // pred_fallthru
      _
    // Predicated region
    $region14: #{grouped_network_forward.1} parent=1 // pred_check
      _
    $region15: #{grouped_network_forward.1} parent=1 // pred_check_branch
      %20 = sbr.rel (0) target = $region17
    $region16: #{grouped_network_forward.1} parent=1 // pred_region
      %s22 = ssub.s32 256, 256
      %23 = vsyncadd [#allocation4], %s22
      %s24 = sshll.u32 [#allocation3], 4
      %s25 = int_to_ptr.vmem [resolvable:$true] %s24
      %30 = dma.hbm_to_vmem [thread:$0]  %s3, 256, %s25, [#allocation4], 128, 128, 8
    $region17: #{grouped_network_forward.1} parent=1 // pred_fallthru
      _
    // Predicated region
    $region18: #{grouped_network_forward.1} parent=1 // pred_check
      _
    $region19: #{grouped_network_forward.1} parent=1 // pred_check_branch
      %32 = sbr.rel (0) target = $region21
    $region20: #{grouped_network_forward.1} parent=1 // pred_region
      _
    $region21: #{grouped_network_forward.1} parent=1 // pred_fallthru
      _
    // Predicated region
    $region22: #{grouped_network_forward.1} parent=1 // pred_check
      _
    $region23: #{grouped_network_forward.1} parent=1 // pred_check_branch
      %34 = sbr.rel (0) target = $region25
    $region24: #{grouped_network_forward.1} parent=1 // pred_region
      %35 = dma.done [#allocation4], 256
    $region25: #{grouped_network_forward.1} parent=1 // pred_fallthru
      _
    %v37 = vld [vmem:[%s1] sm:$0xf]
    %v38 = vld [vmem:[%s1 + $0x4] sm:$0x1]
    %v39 = vld [vmem:[%s0] sm:$0xf]
    %v40 = vld [vmem:[%s0 + $0x4] sm:$0xf]
    %v41 = vld [vmem:[%s0 + $0x8] sm:$0x3]
    %v42 = vld [vmem:[%s2] sm:$0xff]
    %v43 = vld [vmem:[%s2 + $0x8] sm:$0x3]
    %45 = vset.pattern.permute.xlu0 0
    %46 = vperm.xlu0 %45, %v42
    %v47 = vpop.permute.xlu0 %46
    %50 = vset.pattern.permute.xlu0 0
    %51 = vperm.xlu0 %50, %v43
    %v52 = vpop.permute.xlu0 %51
    %v56 = vunpack.c.l.b16 %v37
    %v57 = vunpack.c.l.b16 %v38
    %v58 = vpack.c.b16 %v57, %v56
    %v62 = vunpack.c.l.b16 %v39
    %v63 = vunpack.c.l.b16 %v40
    %v64 = vunpack.c.l.b16 %v41
    %v65 = vpack.c.b16 %v63, %v62
    %v66 = vpack.c.b16 %v64, %v64
    %vm68 = vcmask 162816
    %v70 = vsel %vm68, %v58, 0
    %vm72 = vcmask 1041408
    %v74 = vsel %vm72, %v66, 0
    %76 = vmatprep.subr.bf16.mxu0 0
    %77 = vmatpush1.bf16.msra.mxu0 0
    %78 = vmatprep.subr.bf16.mxu0 0
    %79 = vmatpush1.bf16.msra.mxu0 0
    %80 = vmatprep.subr.bf16.mxu0 0
    %81 = vmatpush1.bf16.msra.mxu0 0
    %82 = vmatprep.subr.bf16.mxu0 0
    %83 = vmatpush1.bf16.msra.mxu0 0
    %84 = vmatprep.subr.bf16.mxu0 0
    %85 = vmatpush1.bf16.msra.mxu0 0
    %86 = vmatprep.subr.bf16.mxu0 0
    %87 = vmatpush1.bf16.msra.mxu0 0
    %88 = vmatprep.subr.bf16.mxu0 0
    %89 = vmatpush1.bf16.msra.mxu0 %v74
    %90 = vmatprep.subr.bf16.mxu0 0
    %91 = vmatpush1.bf16.msra.mxu0 %v65
    %92 = vmatprep.subr.bf16.mxu0 0
    %93 = vmatpush2.bf16.msra.mxu0 0
    %94 = vmatprep.subr.bf16.mxu0 0
    %95 = vmatpush2.bf16.msra.mxu0 0
    %96 = vmatprep.subr.bf16.mxu0 0
    %97 = vmatpush2.bf16.msra.mxu0 0
    %98 = vmatprep.subr.bf16.mxu0 0
    %99 = vmatpush2.bf16.msra.mxu0 0
    %100 = vmatprep.subr.bf16.mxu0 0
    %101 = vmatpush2.bf16.msra.mxu0 0
    %102 = vmatprep.subr.bf16.mxu0 0
    %103 = vmatpush2.bf16.msra.mxu0 0
    %104 = vmatprep.subr.bf16.mxu0 0
    %105 = vmatpush2.bf16.msra.mxu0 0
    %106 = vmatprep.subr.bf16.mxu0 0
    %107 = vmatpush2.bf16.msra.mxu0 0
    %108 = vmatprep.mubr.bf16.mxu0 0
    %109 = vmatmul.mubr.bf16.gmra.mxu0 %v70
    %v110 = vpop.f32.mrf.mxu0
    %v111 = vadd.f32 %v47, %v110
    %v112 = vpop.f32.mrf.mxu0
    %v113 = vpop.f32.mrf.mxu0
    %v114 = vadd.f32 %v52, %v113
    %v115 = vpop.f32.mrf.mxu0
    %116 = vdwg.mxu0
    %v117 = vmax.f32 %v111, 0.0
    %v118 = vmax.f32 %v114, 0.0
    %v119 = vld [vmem:[#allocation3] sm:$0xff]
    %v120 = vld [vmem:[#allocation3 + $0x8] sm:$0x3]
    %122 = vset.pattern.permute.xlu0 0
    %123 = vperm.xlu0 %122, %v119
    %v124 = vpop.permute.xlu0 %123
    %127 = vset.pattern.permute.xlu0 0
    %128 = vperm.xlu0 %127, %v120
    %v129 = vpop.permute.xlu0 %128
    %v131 = vmul.f32 %v124, %v117
    %v132 = vmul.f32 %v129, %v118
    %v133 = vsel %vm72, %v132, 0.0
    %v134 = vadd.f32 %v131, %v133
    %v135 = vrot.slane %v134, 4
    %v136 = vadd.f32 %v134, %v135
    %v137 = vrot.slane %v136, 2
    %v138 = vadd.f32 %v136, %v137
    %v139 = vrot.slane %v138, 1
    %v140 = vadd.f32 %v138, %v139
    %s141 = sld [smem:[#allocation2]]
    %v142 = vstv %s141
    %v143 = vadd.f32 %v140, %v142
    %144 = vst [vmem:[#allocation6] sm:$0x1] %v143
    // Predicated region
    $region26: #{grouped_network_forward.1} parent=1 // pred_check
      _
    $region27: #{grouped_network_forward.1} parent=1 // pred_check_branch
      %146 = sbr.rel (0) target = $region29
    $region28: #{grouped_network_forward.1} parent=1 // pred_region
      %s148 = ssub.s32 16, 16
      %149 = vsyncadd [#allocation5], %s148
      %s151 = sshll.u32 [#allocation6], 4
      %s152 = int_to_ptr.vmem [resolvable:$true] %s151
      %154 = dma.vmem_to_hbm [thread:$0]  %s152, 16, %s5, [#allocation5]
    $region29: #{grouped_network_forward.1} parent=1 // pred_fallthru
      _
    // Predicated region
    $region30: #{grouped_network_forward.1} parent=1 // pred_check
      _
    $region31: #{grouped_network_forward.1} parent=1 // pred_check_branch
      %156 = sbr.rel (0) target = $region33
    $region32: #{grouped_network_forward.1} parent=1 // pred_region
      %157 = dma.done [#allocation5], 16
    $region33: #{grouped_network_forward.1} parent=1 // pred_fallthru
      _
    %158 = vsyncpa [#allocation4], 1
    %159 = vsyncpa [#allocation5], 1

</llo_original>
